<compile_context>
chip_gen: v7x
topology: tpu7x:2x2x1
jax: 0.10.0
libtpu: 0.0.40
codegen_flags: <defaults>
</compile_context>

<pallas_src>
import functools

import jax
import jax.numpy as jnp
from jax.experimental import pallas as pl
from jax.experimental.pallas import tpu as pltpu


def _round_up(x, m):
    return ((x + m - 1) // m) * m


def actor_kernel(action_bound, sd_pad, compute_dtype,
                 s_ref, w_ref, b_ref, out_ref):
    """One batch tile of the fused 4-layer MLP.

    s_ref   : (TB, sd_pad)       f32  state tile (zero padded columns)
    w_ref   : (4, D, D)          f32  packed, zero-padded weight slab
    b_ref   : (4, 1, D)          f32  packed, zero-padded biases
    out_ref : (TB, action_dim)   f32
    """
    x = s_ref[...]  # (TB, sd_pad) f32

    def layer(h, l, first=False):
        w = w_ref[l]                      # (D, D) f32
        if first:
            w = w[:sd_pad, :]             # only the real input rows of W1
        y = jnp.dot(h.astype(compute_dtype), w.astype(compute_dtype),
                    preferred_element_type=jnp.float32)
        return y + b_ref[l]               # f32 bias add, broadcasts (1, D)

    h = jnp.maximum(layer(x, 0, first=True), 0.0)   # ReLU in f32
    h = jnp.maximum(layer(h, 1), 0.0)
    h = jnp.maximum(layer(h, 2), 0.0)
    a = jnp.tanh(layer(h, 3)) * action_bound        # f32 tanh + scale

    # Padded columns of `a` are exactly 0 (zero weights/bias), slice them off.
    out_ref[...] = a[:, :out_ref.shape[1]].astype(out_ref.dtype)


def actor_forward(state, params, action_bound, *,
                  block_b=512, compute_dtype=jnp.float32):
    """state: (B, state_dim) f32. params: dict of (in,out) weights, (1,out) biases.

    compute_dtype=jnp.bfloat16 feeds the MXU bf16 operands (recommended for
    large batches on v6e/v7x); accumulation and elementwise math stay f32.
    """
    state = jnp.asarray(state, jnp.float32)
    B, state_dim = state.shape
    action_dim = params["w4"].shape[1]

    layer_dims = [(state_dim, 64), (64, 32), (32, 16), (16, action_dim)]
    sd_pad = _round_up(state_dim, 8)                            # sublane align
    d_pad = _round_up(max(sd_pad, 64, 32, 16, action_dim), 128)  # lane align

    # Pack all 4 layers into a single zero-padded weight slab + bias slab.
    w_packed = jnp.zeros((4, d_pad, d_pad), jnp.float32)
    b_packed = jnp.zeros((4, 1, d_pad), jnp.float32)
    for i, (fi, fo) in enumerate(layer_dims):
        w_packed = w_packed.at[i, :fi, :fo].set(params[f"w{i + 1}"])
        b_packed = b_packed.at[i, 0, :fo].set(params[f"b{i + 1}"].reshape(fo))

    # Batch tiling: TB rows per grid step, batch padded with zero rows.
    tb = min(block_b, max(8, _round_up(B, 8)))
    b_pad = _round_up(B, tb)
    s_pad = jnp.zeros((b_pad, sd_pad), jnp.float32).at[:B, :state_dim].set(state)

    kernel = functools.partial(actor_kernel, float(action_bound), sd_pad,
                               compute_dtype)

    out = pl.pallas_call(
        kernel,
        out_shape=jax.ShapeDtypeStruct((b_pad, action_dim), jnp.float32),
        grid_spec=pltpu.PrefetchScalarGridSpec(
            num_scalar_prefetch=0,
            grid=(b_pad // tb,),
            in_specs=[
                # state tile: pipelined along the batch grid axis
                pl.BlockSpec((tb, sd_pad), lambda i: (i, 0)),
                # packed weights / biases: constant index_map -> resident in VMEM
                pl.BlockSpec((4, d_pad, d_pad), lambda i: (0, 0, 0)),
                pl.BlockSpec((4, 1, d_pad), lambda i: (0, 0, 0)),
            ],
            out_specs=pl.BlockSpec((tb, action_dim), lambda i: (i, 0)),
        ),
        compiler_params=pltpu.CompilerParams(
            dimension_semantics=("parallel",)),  # batch axis -> both TCs on v7x
    )(s_pad, w_packed, b_packed)

    return out[:B]


def init_actor_params(key, state_dim, action_dim):
    """Deterministic init mimicking PyTorch nn.Linear default (uniform +/- 1/sqrt(fan_in))."""
    dims = [(state_dim, 64), (64, 32), (32, 16), (16, action_dim)]
    params = {}
    for i, (fan_in, fan_out) in enumerate(dims, start=1):
        key, kw, kb = jax.random.split(key, 3)
        bound = 1.0 / jnp.sqrt(fan_in)
        params[f"w{i}"] = jax.random.uniform(
            kw, (fan_in, fan_out), jnp.float32, -bound, bound)
        params[f"b{i}"] = jax.random.uniform(
            kb, (1, fan_out), jnp.float32, -bound, bound)
    return params


def actor_reference(state, params, action_bound):
    """Pure-JAX reference for verification."""
    h = jnp.maximum(state @ params["w1"] + params["b1"], 0.0)
    h = jnp.maximum(h @ params["w2"] + params["b2"], 0.0)
    h = jnp.maximum(h @ params["w3"] + params["b3"], 0.0)
    a = jnp.tanh(h @ params["w4"] + params["b4"]) * action_bound
    return a


if __name__ == "__main__":
    key = jax.random.PRNGKey(0)
    B, state_dim, action_dim = 2, 8, 4
    action_bound = 2.0

    key, ks = jax.random.split(key)
    state = jax.random.normal(ks, (B, state_dim), dtype=jnp.float32)
    params = init_actor_params(key, state_dim, action_dim)
    ref = actor_reference(state, params, action_bound)

    # 1) Small batch, f32 path (exact vs reference).
    out = jax.block_until_ready(actor_forward(state, params, action_bound))
    assert out.shape == (B, action_dim)
    assert jnp.allclose(out, ref, atol=1e-5, rtol=1e-5), "f32 mismatch vs reference"

    # 2) Small batch, bf16 MXU operands (v6e/v7x fast path) — looser tolerance.
    out_bf16 = jax.block_until_ready(
        actor_forward(state, params, action_bound, compute_dtype=jnp.bfloat16))
    assert jnp.allclose(out_bf16, ref, atol=5e-2, rtol=5e-2), "bf16 mismatch vs reference"

    # 3) Larger, non-multiple batch to exercise the batch grid + row clipping.
    key, kb = jax.random.split(key)
    big_state = jax.random.normal(kb, (1000, state_dim), dtype=jnp.float32)
    big_out = jax.block_until_ready(
        actor_forward(big_state, params, action_bound, block_b=512))
    big_ref = actor_reference(big_state, params, action_bound)
    assert big_out.shape == (1000, action_dim)
    assert jnp.allclose(big_out, big_ref, atol=1e-5, rtol=1e-5), "batched mismatch"

    print("KERNEL_OK")
</pallas_src>

<mosaic_0001>
module attributes {stable_mosaic.version = 11 : i64} {
  func.func @actor_kernel(%arg0: i32, %arg1: memref<8x8xf32, #tpu.memory_space<vmem>>, %arg2: memref<4x128x128xf32, #tpu.memory_space<vmem>>, %arg3: memref<4x1x128xf32, #tpu.memory_space<vmem>>, %arg4: memref<8x4xf32, #tpu.memory_space<vmem>>) attributes {dimension_semantics = [#tpu.dimension_semantics<parallel>], iteration_bounds = array<i64: 1>, scalar_prefetch = 0 : i64, scratch_operands = 0 : i64, tpu.core_type = #tpu.core_type<tc>, window_params = [{transform_indices = @transform_0, window_bounds = array<i64: 8, 8>}, {pipeline_mode = #tpu.pipeline_mode<synchronous>, transform_indices = @transform_1, window_bounds = array<i64: 4, 128, 128>}, {pipeline_mode = #tpu.pipeline_mode<synchronous>, transform_indices = @transform_2, window_bounds = array<i64: 4, 1, 128>}, {transform_indices = @transform_3, window_bounds = array<i64: 8, 4>}]} {
    %c0 = arith.constant 0 : index
    %c0_0 = arith.constant 0 : index
    %0 = vector.load %arg1[%c0, %c0_0] : memref<8x8xf32, #tpu.memory_space<vmem>>, vector<8x8xf32>
    %c0_1 = arith.constant 0 : index
    %c0_2 = arith.constant 0 : index
    %c0_3 = arith.constant 0 : index
    %1 = vector.load %arg2[%c0_1, %c0_2, %c0_3] : memref<4x128x128xf32, #tpu.memory_space<vmem>>, vector<1x128x128xf32>
    %2 = vector.shape_cast %1 : vector<1x128x128xf32> to vector<128x128xf32>
    %3 = vector.extract_strided_slice %2 {offsets = [0, 0], sizes = [8, 128], strides = [1, 1]} : vector<128x128xf32> to vector<8x128xf32>
    %cst = arith.constant dense<0.000000e+00> : vector<8x128xf32>
    %4 = tpu.matmul %0, %3, %cst {dimension_numbers = #tpu.dot_dimension_numbers<[1], [0], [0], [1], [0, 0, 1, 1], [], []>} : vector<8x8xf32>, vector<8x128xf32>, vector<8x128xf32> -> vector<8x128xf32>
    %c0_4 = arith.constant 0 : index
    %c0_5 = arith.constant 0 : index
    %c0_6 = arith.constant 0 : index
    %5 = vector.load %arg3[%c0_4, %c0_5, %c0_6] : memref<4x1x128xf32, #tpu.memory_space<vmem>>, vector<1x1x128xf32>
    %6 = vector.shape_cast %5 : vector<1x1x128xf32> to vector<1x128xf32>
    %7 = vector.broadcast %6 : vector<1x128xf32> to vector<8x128xf32>
    %8 = arith.addf %4, %7 : vector<8x128xf32>
    %cst_7 = arith.constant 0.000000e+00 : f32
    %9 = vector.broadcast %cst_7 : f32 to vector<8x128xf32>
    %10 = arith.maximumf %8, %9 : vector<8x128xf32>
    %c1 = arith.constant 1 : index
    %c0_8 = arith.constant 0 : index
    %c0_9 = arith.constant 0 : index
    %11 = vector.load %arg2[%c1, %c0_8, %c0_9] : memref<4x128x128xf32, #tpu.memory_space<vmem>>, vector<1x128x128xf32>
    %12 = vector.shape_cast %11 : vector<1x128x128xf32> to vector<128x128xf32>
    %cst_10 = arith.constant dense<0.000000e+00> : vector<8x128xf32>
    %13 = tpu.matmul %10, %12, %cst_10 {dimension_numbers = #tpu.dot_dimension_numbers<[1], [0], [0], [1], [0, 0, 1, 1], [], []>} : vector<8x128xf32>, vector<128x128xf32>, vector<8x128xf32> -> vector<8x128xf32>
    %c1_11 = arith.constant 1 : index
    %c0_12 = arith.constant 0 : index
    %c0_13 = arith.constant 0 : index
    %14 = vector.load %arg3[%c1_11, %c0_12, %c0_13] : memref<4x1x128xf32, #tpu.memory_space<vmem>>, vector<1x1x128xf32>
    %15 = vector.shape_cast %14 : vector<1x1x128xf32> to vector<1x128xf32>
    %16 = vector.broadcast %15 : vector<1x128xf32> to vector<8x128xf32>
    %17 = arith.addf %13, %16 : vector<8x128xf32>
    %cst_14 = arith.constant 0.000000e+00 : f32
    %18 = vector.broadcast %cst_14 : f32 to vector<8x128xf32>
    %19 = arith.maximumf %17, %18 : vector<8x128xf32>
    %c2 = arith.constant 2 : index
    %c0_15 = arith.constant 0 : index
    %c0_16 = arith.constant 0 : index
    %20 = vector.load %arg2[%c2, %c0_15, %c0_16] : memref<4x128x128xf32, #tpu.memory_space<vmem>>, vector<1x128x128xf32>
    %21 = vector.shape_cast %20 : vector<1x128x128xf32> to vector<128x128xf32>
    %cst_17 = arith.constant dense<0.000000e+00> : vector<8x128xf32>
    %22 = tpu.matmul %19, %21, %cst_17 {dimension_numbers = #tpu.dot_dimension_numbers<[1], [0], [0], [1], [0, 0, 1, 1], [], []>} : vector<8x128xf32>, vector<128x128xf32>, vector<8x128xf32> -> vector<8x128xf32>
    %c2_18 = arith.constant 2 : index
    %c0_19 = arith.constant 0 : index
    %c0_20 = arith.constant 0 : index
    %23 = vector.load %arg3[%c2_18, %c0_19, %c0_20] : memref<4x1x128xf32, #tpu.memory_space<vmem>>, vector<1x1x128xf32>
    %24 = vector.shape_cast %23 : vector<1x1x128xf32> to vector<1x128xf32>
    %25 = vector.broadcast %24 : vector<1x128xf32> to vector<8x128xf32>
    %26 = arith.addf %22, %25 : vector<8x128xf32>
    %cst_21 = arith.constant 0.000000e+00 : f32
    %27 = vector.broadcast %cst_21 : f32 to vector<8x128xf32>
    %28 = arith.maximumf %26, %27 : vector<8x128xf32>
    %c3 = arith.constant 3 : index
    %c0_22 = arith.constant 0 : index
    %c0_23 = arith.constant 0 : index
    %29 = vector.load %arg2[%c3, %c0_22, %c0_23] : memref<4x128x128xf32, #tpu.memory_space<vmem>>, vector<1x128x128xf32>
    %30 = vector.shape_cast %29 : vector<1x128x128xf32> to vector<128x128xf32>
    %cst_24 = arith.constant dense<0.000000e+00> : vector<8x128xf32>
    %31 = tpu.matmul %28, %30, %cst_24 {dimension_numbers = #tpu.dot_dimension_numbers<[1], [0], [0], [1], [0, 0, 1, 1], [], []>} : vector<8x128xf32>, vector<128x128xf32>, vector<8x128xf32> -> vector<8x128xf32>
    %c3_25 = arith.constant 3 : index
    %c0_26 = arith.constant 0 : index
    %c0_27 = arith.constant 0 : index
    %32 = vector.load %arg3[%c3_25, %c0_26, %c0_27] : memref<4x1x128xf32, #tpu.memory_space<vmem>>, vector<1x1x128xf32>
    %33 = vector.shape_cast %32 : vector<1x1x128xf32> to vector<1x128xf32>
    %34 = vector.broadcast %33 : vector<1x128xf32> to vector<8x128xf32>
    %35 = arith.addf %31, %34 : vector<8x128xf32>
    %36 = math.tanh %35 : vector<8x128xf32>
    %cst_28 = arith.constant 2.000000e+00 : f32
    %37 = vector.broadcast %cst_28 : f32 to vector<8x128xf32>
    %38 = arith.mulf %36, %37 : vector<8x128xf32>
    %39 = vector.extract_strided_slice %38 {offsets = [0, 0], sizes = [8, 4], strides = [1, 1]} : vector<8x128xf32> to vector<8x4xf32>
    %c0_29 = arith.constant 0 : index
    %c0_30 = arith.constant 0 : index
    %40 = vector.load %arg4[%c0_29, %c0_30] : memref<8x4xf32, #tpu.memory_space<vmem>>, vector<8x4xf32>
    tpu.vector_store %arg4[%c0_29, %c0_30], %39 {strides = array<i32>} : memref<8x4xf32, #tpu.memory_space<vmem>>, vector<8x4xf32>,
    return
  }
  func.func @transform_0(%arg0: i32) -> (i32, i32) {
    %c0_i32 = arith.constant 0 : i32
    %c0_i32_0 = arith.constant 0 : i32
    return %arg0, %c0_i32 : i32, i32
  }
  func.func @transform_1(%arg0: i32) -> (i32, i32, i32) {
    %c0_i32 = arith.constant 0 : i32
    %c0_i32_0 = arith.constant 0 : i32
    %c0_i32_1 = arith.constant 0 : i32
    %c0_i32_2 = arith.constant 0 : i32
    return %c0_i32, %c0_i32_0, %c0_i32_1 : i32, i32, i32
  }
  func.func @transform_2(%arg0: i32) -> (i32, i32, i32) {
    %c0_i32 = arith.constant 0 : i32
    %c0_i32_0 = arith.constant 0 : i32
    %c0_i32_1 = arith.constant 0 : i32
    %c0_i32_2 = arith.constant 0 : i32
    return %c0_i32, %c0_i32_0, %c0_i32_1 : i32, i32, i32
  }
  func.func @transform_3(%arg0: i32) -> (i32, i32) {
    %c0_i32 = arith.constant 0 : i32
    %c0_i32_0 = arith.constant 0 : i32
    return %arg0, %c0_i32 : i32, i32
  }
}

</mosaic_0001>

<llo_original>
// kernel: tpu_custom_call.1
$region0: #{tpu_custom_call.1}
  #allocation0 [shape = 'u32[]', space=smem, size = 0x4, offset = 0x4, fixed_abs, tag = 'smem constant byte address 0x4 - core index']
  #allocation1 [shape = 'u32[144,128]{1,0:T(1,128)}', space=vmem, size = 0x12000, scoped, tag = 'internal scratch']
  %s0 = inlined_call_operand.hbm [shape: f32[8,8], index: 0, kind: input, shape index: {}]
  %s1 = inlined_call_operand.hbm [shape: f32[4,128,128], index: 1, kind: input, shape index: {}]
  %s2 = inlined_call_operand.vmem [shape: f32[4,1,128], index: 2, kind: input, shape index: {}]
  %s3 = inlined_call_operand.vmem [shape: f32[8,4], index: 3, kind: output, shape index: {}]
  %s4 = sld [smem:[#allocation0]]
  $region30: #{tpu_custom_call.1} parent=0
    _
  %s6 = ssub.s32 1, %s4
  %s7 = scalar_select 0, %s6, %s4
  $region1: #{tpu_custom_call.1} parent=0
    #allocation2 [shape = 'u8[4096]{0}', space=vmem, size = 0x1000, scoped, tag = 'input window, operand 0, single buffered']
    #allocation3 [shape = 's32[1]{0}', space=sflag, size = 0x4, scoped, tag = 'scoped memory for tpu_custom_call.1']
    #allocation4 [shape = 'u8[262144]{0}', space=vmem, size = 0x40000, scoped, tag = 'input window, operand 1, single buffered']
    #allocation5 [shape = 's32[1]{0}', space=sflag, size = 0x4, scoped, tag = 'scoped memory for tpu_custom_call.1']
    %8 = vsyncpa [#allocation3], 0
    %9 = vsyncpa [#allocation5], 0
    // Predicated region
    $region2: #{tpu_custom_call.1} parent=1 // pred_check
      _
    $region3: #{tpu_custom_call.1} parent=1 // pred_check_branch
      %11 = sbr.rel (0) target = $region5
    $region4: #{tpu_custom_call.1} parent=1 // pred_region
      %s13 = ssub.s32 128, 128
      %14 = vsyncadd [#allocation3], %s13
      %s16 = sshll.u32 [#allocation2], 4
      %s17 = int_to_ptr.vmem [resolvable:$true] %s16
      %19 = dma.hbm_to_vmem [thread:$0]  %s0, 128, %s17, [#allocation3]
    $region5: #{tpu_custom_call.1} parent=1 // pred_fallthru
      _
    // Predicated region
    $region6: #{tpu_custom_call.1} parent=1 // pred_check
      _
    $region7: #{tpu_custom_call.1} parent=1 // pred_check_branch
      %21 = sbr.rel (0) target = $region9
    $region8: #{tpu_custom_call.1} parent=1 // pred_region
      %s23 = ssub.s32 8192, 8192
      %24 = vsyncadd [#allocation5], %s23
      %s25 = sshll.u32 [#allocation4], 4
      %s26 = int_to_ptr.vmem [resolvable:$true] %s25
      %31 = dma.hbm_to_vmem [thread:$0]  %s1, 8192, %s26, [#allocation5], 128, 128, 8
    $region9: #{tpu_custom_call.1} parent=1 // pred_fallthru
      _
    // Predicated region
    $region10: #{tpu_custom_call.1} parent=1 // pred_check
      _
    $region11: #{tpu_custom_call.1} parent=1 // pred_check_branch
      %33 = sbr.rel (0) target = $region13
    $region12: #{tpu_custom_call.1} parent=1 // pred_region
      _
    $region13: #{tpu_custom_call.1} parent=1 // pred_fallthru
      _
    // Predicated region
    $region14: #{tpu_custom_call.1} parent=1 // pred_check
      _
    $region15: #{tpu_custom_call.1} parent=1 // pred_check_branch
      %35 = sbr.rel (0) target = $region17
    $region16: #{tpu_custom_call.1} parent=1 // pred_region
      %36 = dma.done [#allocation3], 128
    $region17: #{tpu_custom_call.1} parent=1 // pred_fallthru
      _
    // Predicated region
    $region18: #{tpu_custom_call.1} parent=1 // pred_check
      _
    $region19: #{tpu_custom_call.1} parent=1 // pred_check_branch
      %38 = sbr.rel (0) target = $region21
    $region20: #{tpu_custom_call.1} parent=1 // pred_region
      %39 = dma.done [#allocation5], 8192
    $region21: #{tpu_custom_call.1} parent=1 // pred_fallthru
      _
    %v40 = vld [vmem:[#allocation2] sm:$0xff]
    %v41 = vld [vmem:[#allocation4] sm:$0xff]
    %v42 = vld [vmem:[%s2] sm:$0x1]
    %v44 = vlaneseq
    %v45 = vshrl.u32 %v44, 7
    %v46 = vsub.s32 0, %v45
    %v47 = vrot.slane %v42, %v46
    %vm49 = vcmask 64512
    %v51 = vsel %vm49, %v40, 0
    %53 = vmatprep.subr.mxu0 0.0
    %54 = vmatpush1.msra.mxu0 %v41
    %55 = vmatprep.subr.mxu0 0.0
    %56 = vmatpush1.msra.mxu0 0.0
    %57 = vmatprep.subr.mxu0 0.0
    %58 = vmatpush1.msra.mxu0 0.0
    %59 = vmatprep.subr.mxu0 0.0
    %60 = vmatpush1.msra.mxu0 0.0
    %61 = vmatprep.subr.mxu0 0.0
    %62 = vmatpush1.msra.mxu0 0.0
    %63 = vmatprep.subr.mxu0 0.0
    %64 = vmatpush1.msra.mxu0 0.0
    %65 = vmatprep.subr.mxu0 0.0
    %66 = vmatpush1.msra.mxu0 0.0
    %67 = vmatprep.subr.mxu0 0.0
    %68 = vmatpush1.msra.mxu0 0.0
    %69 = vmatprep.subr.mxu0 0.0
    %70 = vmatpush1.msra.mxu0 0.0
    %71 = vmatprep.subr.mxu0 0.0
    %72 = vmatpush1.msra.mxu0 0.0
    %73 = vmatprep.subr.mxu0 0.0
    %74 = vmatpush1.msra.mxu0 0.0
    %75 = vmatprep.subr.mxu0 0.0
    %76 = vmatpush1.msra.mxu0 0.0
    %77 = vmatprep.subr.mxu0 0.0
    %78 = vmatpush1.msra.mxu0 0.0
    %79 = vmatprep.subr.mxu0 0.0
    %80 = vmatpush1.msra.mxu0 0.0
    %81 = vmatprep.subr.mxu0 0.0
    %82 = vmatpush1.msra.mxu0 0.0
    %83 = vmatprep.subr.mxu0 0.0
    %84 = vmatpush1.msra.mxu0 0.0
    %85 = vmatprep.subr.mxu0 0.0
    %86 = vmatpush1.msra.mxu0 0.0
    %87 = vmatprep.subr.mxu0 0.0
    %88 = vmatpush1.msra.mxu0 0.0
    %89 = vmatprep.subr.mxu0 0.0
    %90 = vmatpush1.msra.mxu0 0.0
    %91 = vmatprep.subr.mxu0 0.0
    %92 = vmatpush1.msra.mxu0 0.0
    %93 = vmatprep.subr.mxu0 0.0
    %94 = vmatpush1.msra.mxu0 0.0
    %95 = vmatprep.subr.mxu0 0.0
    %96 = vmatpush1.msra.mxu0 0.0
    %97 = vmatprep.subr.mxu0 0.0
    %98 = vmatpush1.msra.mxu0 0.0
    %99 = vmatprep.subr.mxu0 0.0
    %100 = vmatpush1.msra.mxu0 0.0
    %101 = vmatprep.subr.mxu0 0.0
    %102 = vmatpush1.msra.mxu0 0.0
    %103 = vmatprep.subr.mxu0 0.0
    %104 = vmatpush1.msra.mxu0 0.0
    %105 = vmatprep.subr.mxu0 0.0
    %106 = vmatpush1.msra.mxu0 0.0
    %107 = vmatprep.subr.mxu0 0.0
    %108 = vmatpush1.msra.mxu0 0.0
    %109 = vmatprep.subr.mxu0 0.0
    %110 = vmatpush1.msra.mxu0 0.0
    %111 = vmatprep.subr.mxu0 0.0
    %112 = vmatpush1.msra.mxu0 0.0
    %113 = vmatprep.subr.mxu0 0.0
    %114 = vmatpush1.msra.mxu0 0.0
    %115 = vmatprep.subr.mxu0 0.0
    %116 = vmatpush1.msra.mxu0 0.0
    %117 = vmatprep.mubr.f32.mxu0 0.0
    %118 = vmatmul.mubr.f32.gmra.mrb[0].mxu0 %v51
    %v119 = vpop.f32.mrb[0].mxu0
    %v120 = vadd.f32 %v47, %v119
    %v121 = vpop.f32.mrb[0].mxu0
    %122 = vdwg.mxu0
    %v123 = vmax.f32 %v120, 0.0
    %s124 = scalar_lea.vmem [#allocation4], 128
    %v125 = vld [vmem:[%s124] sm:$0xff]
    %v126 = vld [vmem:[%s124 + $0x8] sm:$0xff]
    %v127 = vld [vmem:[%s124 + $0x10] sm:$0xff]
    %v128 = vld [vmem:[%s124 + $0x18] sm:$0xff]
    %v129 = vld [vmem:[%s124 + $0x20] sm:$0xff]
    %v130 = vld [vmem:[%s124 + $0x28] sm:$0xff]
    %v131 = vld [vmem:[%s124 + $0x30] sm:$0xff]
    %v132 = vld [vmem:[%s124 + $0x38] sm:$0xff]
    %v133 = vld [vmem:[%s124 + $0x40] sm:$0xff]
    %v134 = vld [vmem:[%s124 + $0x48] sm:$0xff]
    %v135 = vld [vmem:[%s124 + $0x50] sm:$0xff]
    %v136 = vld [vmem:[%s124 + $0x58] sm:$0xff]
    %v137 = vld [vmem:[%s124 + $0x60] sm:$0xff]
    %v138 = vld [vmem:[%s124 + $0x68] sm:$0xff]
    %v139 = vld [vmem:[%s124 + $0x70] sm:$0xff]
    %v140 = vld [vmem:[%s124 + $0x78] sm:$0xff]
    %s141 = scalar_lea.vmem %s2, 1
    %v142 = vld [vmem:[%s141] sm:$0x1]
    %v144 = vlaneseq
    %v145 = vshrl.u32 %v144, 7
    %v146 = vsub.s32 0, %v145
    %v147 = vrot.slane %v142, %v146
    %149 = vmatprep.subr.mxu0 0.0
    %150 = vmatpush1.msra.mxu0 %v125
    %151 = vmatprep.subr.mxu0 0.0
    %152 = vmatpush1.msra.mxu0 %v126
    %153 = vmatprep.subr.mxu0 0.0
    %154 = vmatpush1.msra.mxu0 %v127
    %155 = vmatprep.subr.mxu0 0.0
    %156 = vmatpush1.msra.mxu0 %v128
    %157 = vmatprep.subr.mxu0 0.0
    %158 = vmatpush1.msra.mxu0 %v129
    %159 = vmatprep.subr.mxu0 0.0
    %160 = vmatpush1.msra.mxu0 %v130
    %161 = vmatprep.subr.mxu0 0.0
    %162 = vmatpush1.msra.mxu0 %v131
    %163 = vmatprep.subr.mxu0 0.0
    %164 = vmatpush1.msra.mxu0 %v132
    %165 = vmatprep.subr.mxu0 0.0
    %166 = vmatpush1.msra.mxu0 %v133
    %167 = vmatprep.subr.mxu0 0.0
    %168 = vmatpush1.msra.mxu0 %v134
    %169 = vmatprep.subr.mxu0 0.0
    %170 = vmatpush1.msra.mxu0 %v135
    %171 = vmatprep.subr.mxu0 0.0
    %172 = vmatpush1.msra.mxu0 %v136
    %173 = vmatprep.subr.mxu0 0.0
    %174 = vmatpush1.msra.mxu0 %v137
    %175 = vmatprep.subr.mxu0 0.0
    %176 = vmatpush1.msra.mxu0 %v138
    %177 = vmatprep.subr.mxu0 0.0
    %178 = vmatpush1.msra.mxu0 %v139
    %179 = vmatprep.subr.mxu0 0.0
    %180 = vmatpush1.msra.mxu0 %v140
    %181 = vmatprep.subr.mxu0 0.0
    %182 = vmatpush1.msra.mxu0 0.0
    %183 = vmatprep.subr.mxu0 0.0
    %184 = vmatpush1.msra.mxu0 0.0
    %185 = vmatprep.subr.mxu0 0.0
    %186 = vmatpush1.msra.mxu0 0.0
    %187 = vmatprep.subr.mxu0 0.0
    %188 = vmatpush1.msra.mxu0 0.0
    %189 = vmatprep.subr.mxu0 0.0
    %190 = vmatpush1.msra.mxu0 0.0
    %191 = vmatprep.subr.mxu0 0.0
    %192 = vmatpush1.msra.mxu0 0.0
    %193 = vmatprep.subr.mxu0 0.0
    %194 = vmatpush1.msra.mxu0 0.0
    %195 = vmatprep.subr.mxu0 0.0
    %196 = vmatpush1.msra.mxu0 0.0
    %197 = vmatprep.subr.mxu0 0.0
    %198 = vmatpush1.msra.mxu0 0.0
    %199 = vmatprep.subr.mxu0 0.0
    %200 = vmatpush1.msra.mxu0 0.0
    %201 = vmatprep.subr.mxu0 0.0
    %202 = vmatpush1.msra.mxu0 0.0
    %203 = vmatprep.subr.mxu0 0.0
    %204 = vmatpush1.msra.mxu0 0.0
    %205 = vmatprep.subr.mxu0 0.0
    %206 = vmatpush1.msra.mxu0 0.0
    %207 = vmatprep.subr.mxu0 0.0
    %208 = vmatpush1.msra.mxu0 0.0
    %209 = vmatprep.subr.mxu0 0.0
    %210 = vmatpush1.msra.mxu0 0.0
    %211 = vmatprep.subr.mxu0 0.0
    %212 = vmatpush1.msra.mxu0 0.0
    %213 = vmatprep.mubr.f32.mxu0 0.0
    %214 = vmatmul.mubr.f32.gmra.mrb[0].mxu0 %v123
    %v215 = vpop.f32.mrb[0].mxu0
    %v216 = vadd.f32 %v147, %v215
    %v217 = vpop.f32.mrb[0].mxu0
    %218 = vdwg.mxu0
    %v219 = vmax.f32 %v216, 0.0
    %s220 = scalar_lea.vmem [#allocation4], 256
    %v221 = vld [vmem:[%s220] sm:$0xff]
    %v222 = vld [vmem:[%s220 + $0x8] sm:$0xff]
    %v223 = vld [vmem:[%s220 + $0x10] sm:$0xff]
    %v224 = vld [vmem:[%s220 + $0x18] sm:$0xff]
    %v225 = vld [vmem:[%s220 + $0x20] sm:$0xff]
    %v226 = vld [vmem:[%s220 + $0x28] sm:$0xff]
    %v227 = vld [vmem:[%s220 + $0x30] sm:$0xff]
    %v228 = vld [vmem:[%s220 + $0x38] sm:$0xff]
    %v229 = vld [vmem:[%s220 + $0x40] sm:$0xff]
    %v230 = vld [vmem:[%s220 + $0x48] sm:$0xff]
    %v231 = vld [vmem:[%s220 + $0x50] sm:$0xff]
    %v232 = vld [vmem:[%s220 + $0x58] sm:$0xff]
    %v233 = vld [vmem:[%s220 + $0x60] sm:$0xff]
    %v234 = vld [vmem:[%s220 + $0x68] sm:$0xff]
    %v235 = vld [vmem:[%s220 + $0x70] sm:$0xff]
    %v236 = vld [vmem:[%s220 + $0x78] sm:$0xff]
    %s237 = scalar_lea.vmem %s2, 2
    %v238 = vld [vmem:[%s237] sm:$0x1]
    %v240 = vlaneseq
    %v241 = vshrl.u32 %v240, 7
    %v242 = vsub.s32 0, %v241
    %v243 = vrot.slane %v238, %v242
    %245 = vmatprep.subr.mxu0 0.0
    %246 = vmatpush1.msra.mxu0 %v221
    %247 = vmatprep.subr.mxu0 0.0
    %248 = vmatpush1.msra.mxu0 %v222
    %249 = vmatprep.subr.mxu0 0.0
    %250 = vmatpush1.msra.mxu0 %v223
    %251 = vmatprep.subr.mxu0 0.0
    %252 = vmatpush1.msra.mxu0 %v224
    %253 = vmatprep.subr.mxu0 0.0
    %254 = vmatpush1.msra.mxu0 %v225
    %255 = vmatprep.subr.mxu0 0.0
    %256 = vmatpush1.msra.mxu0 %v226
    %257 = vmatprep.subr.mxu0 0.0
    %258 = vmatpush1.msra.mxu0 %v227
    %259 = vmatprep.subr.mxu0 0.0
    %260 = vmatpush1.msra.mxu0 %v228
    %261 = vmatprep.subr.mxu0 0.0
    %262 = vmatpush1.msra.mxu0 %v229
    %263 = vmatprep.subr.mxu0 0.0
    %264 = vmatpush1.msra.mxu0 %v230
    %265 = vmatprep.subr.mxu0 0.0
    %266 = vmatpush1.msra.mxu0 %v231
    %267 = vmatprep.subr.mxu0 0.0
    %268 = vmatpush1.msra.mxu0 %v232
    %269 = vmatprep.subr.mxu0 0.0
    %270 = vmatpush1.msra.mxu0 %v233
    %271 = vmatprep.subr.mxu0 0.0
    %272 = vmatpush1.msra.mxu0 %v234
    %273 = vmatprep.subr.mxu0 0.0
    %274 = vmatpush1.msra.mxu0 %v235
    %275 = vmatprep.subr.mxu0 0.0
    %276 = vmatpush1.msra.mxu0 %v236
    %277 = vmatprep.subr.mxu0 0.0
    %278 = vmatpush1.msra.mxu0 0.0
    %279 = vmatprep.subr.mxu0 0.0
    %280 = vmatpush1.msra.mxu0 0.0
    %281 = vmatprep.subr.mxu0 0.0
    %282 = vmatpush1.msra.mxu0 0.0
    %283 = vmatprep.subr.mxu0 0.0
    %284 = vmatpush1.msra.mxu0 0.0
    %285 = vmatprep.subr.mxu0 0.0
    %286 = vmatpush1.msra.mxu0 0.0
    %287 = vmatprep.subr.mxu0 0.0
    %288 = vmatpush1.msra.mxu0 0.0
    %289 = vmatprep.subr.mxu0 0.0
    %290 = vmatpush1.msra.mxu0 0.0
    %291 = vmatprep.subr.mxu0 0.0
    %292 = vmatpush1.msra.mxu0 0.0
    %293 = vmatprep.subr.mxu0 0.0
    %294 = vmatpush1.msra.mxu0 0.0
    %295 = vmatprep.subr.mxu0 0.0
    %296 = vmatpush1.msra.mxu0 0.0
    %297 = vmatprep.subr.mxu0 0.0
    %298 = vmatpush1.msra.mxu0 0.0
    %299 = vmatprep.subr.mxu0 0.0
    %300 = vmatpush1.msra.mxu0 0.0
    %301 = vmatprep.subr.mxu0 0.0
    %302 = vmatpush1.msra.mxu0 0.0
    %303 = vmatprep.subr.mxu0 0.0
    %304 = vmatpush1.msra.mxu0 0.0
    %305 = vmatprep.subr.mxu0 0.0
    %306 = vmatpush1.msra.mxu0 0.0
    %307 = vmatprep.subr.mxu0 0.0
    %308 = vmatpush1.msra.mxu0 0.0
    %309 = vmatprep.mubr.f32.mxu0 0.0
    %310 = vmatmul.mubr.f32.gmra.mrb[0].mxu0 %v219
    %v311 = vpop.f32.mrb[0].mxu0
    %v312 = vadd.f32 %v243, %v311
    %v313 = vpop.f32.mrb[0].mxu0
    %314 = vdwg.mxu0
    %v315 = vmax.f32 %v312, 0.0
    %s316 = scalar_lea.vmem [#allocation4], 384
    %v317 = vld [vmem:[%s316] sm:$0xff]
    %v318 = vld [vmem:[%s316 + $0x8] sm:$0xff]
    %v319 = vld [vmem:[%s316 + $0x10] sm:$0xff]
    %v320 = vld [vmem:[%s316 + $0x18] sm:$0xff]
    %v321 = vld [vmem:[%s316 + $0x20] sm:$0xff]
    %v322 = vld [vmem:[%s316 + $0x28] sm:$0xff]
    %v323 = vld [vmem:[%s316 + $0x30] sm:$0xff]
    %v324 = vld [vmem:[%s316 + $0x38] sm:$0xff]
    %v325 = vld [vmem:[%s316 + $0x40] sm:$0xff]
    %v326 = vld [vmem:[%s316 + $0x48] sm:$0xff]
    %v327 = vld [vmem:[%s316 + $0x50] sm:$0xff]
    %v328 = vld [vmem:[%s316 + $0x58] sm:$0xff]
    %v329 = vld [vmem:[%s316 + $0x60] sm:$0xff]
    %v330 = vld [vmem:[%s316 + $0x68] sm:$0xff]
    %v331 = vld [vmem:[%s316 + $0x70] sm:$0xff]
    %v332 = vld [vmem:[%s316 + $0x78] sm:$0xff]
    %s333 = scalar_lea.vmem %s2, 3
    %v334 = vld [vmem:[%s333] sm:$0x1]
    %v336 = vlaneseq
    %v337 = vshrl.u32 %v336, 7
    %v338 = vsub.s32 0, %v337
    %v339 = vrot.slane %v334, %v338
    %341 = vmatprep.subr.mxu0 0.0
    %342 = vmatpush1.msra.mxu0 %v317
    %343 = vmatprep.subr.mxu0 0.0
    %344 = vmatpush1.msra.mxu0 %v318
    %345 = vmatprep.subr.mxu0 0.0
    %346 = vmatpush1.msra.mxu0 %v319
    %347 = vmatprep.subr.mxu0 0.0
    %348 = vmatpush1.msra.mxu0 %v320
    %349 = vmatprep.subr.mxu0 0.0
    %350 = vmatpush1.msra.mxu0 %v321
    %351 = vmatprep.subr.mxu0 0.0
    %352 = vmatpush1.msra.mxu0 %v322
    %353 = vmatprep.subr.mxu0 0.0
    %354 = vmatpush1.msra.mxu0 %v323
    %355 = vmatprep.subr.mxu0 0.0
    %356 = vmatpush1.msra.mxu0 %v324
    %357 = vmatprep.subr.mxu0 0.0
    %358 = vmatpush1.msra.mxu0 %v325
    %359 = vmatprep.subr.mxu0 0.0
    %360 = vmatpush1.msra.mxu0 %v326
    %361 = vmatprep.subr.mxu0 0.0
    %362 = vmatpush1.msra.mxu0 %v327
    %363 = vmatprep.subr.mxu0 0.0
    %364 = vmatpush1.msra.mxu0 %v328
    %365 = vmatprep.subr.mxu0 0.0
    %366 = vmatpush1.msra.mxu0 %v329
    %367 = vmatprep.subr.mxu0 0.0
    %368 = vmatpush1.msra.mxu0 %v330
    %369 = vmatprep.subr.mxu0 0.0
    %370 = vmatpush1.msra.mxu0 %v331
    %371 = vmatprep.subr.mxu0 0.0
    %372 = vmatpush1.msra.mxu0 %v332
    %373 = vmatprep.subr.mxu0 0.0
    %374 = vmatpush1.msra.mxu0 0.0
    %375 = vmatprep.subr.mxu0 0.0
    %376 = vmatpush1.msra.mxu0 0.0
    %377 = vmatprep.subr.mxu0 0.0
    %378 = vmatpush1.msra.mxu0 0.0
    %379 = vmatprep.subr.mxu0 0.0
    %380 = vmatpush1.msra.mxu0 0.0
    %381 = vmatprep.subr.mxu0 0.0
    %382 = vmatpush1.msra.mxu0 0.0
    %383 = vmatprep.subr.mxu0 0.0
    %384 = vmatpush1.msra.mxu0 0.0
    %385 = vmatprep.subr.mxu0 0.0
    %386 = vmatpush1.msra.mxu0 0.0
    %387 = vmatprep.subr.mxu0 0.0
    %388 = vmatpush1.msra.mxu0 0.0
    %389 = vmatprep.subr.mxu0 0.0
    %390 = vmatpush1.msra.mxu0 0.0
    %391 = vmatprep.subr.mxu0 0.0
    %392 = vmatpush1.msra.mxu0 0.0
    %393 = vmatprep.subr.mxu0 0.0
    %394 = vmatpush1.msra.mxu0 0.0
    %395 = vmatprep.subr.mxu0 0.0
    %396 = vmatpush1.msra.mxu0 0.0
    %397 = vmatprep.subr.mxu0 0.0
    %398 = vmatpush1.msra.mxu0 0.0
    %399 = vmatprep.subr.mxu0 0.0
    %400 = vmatpush1.msra.mxu0 0.0
    %401 = vmatprep.subr.mxu0 0.0
    %402 = vmatpush1.msra.mxu0 0.0
    %403 = vmatprep.subr.mxu0 0.0
    %404 = vmatpush1.msra.mxu0 0.0
    %405 = vmatprep.mubr.f32.mxu0 0.0
    %406 = vmatmul.mubr.f32.gmra.mrb[0].mxu0 %v315
    %v407 = vpop.f32.mrb[0].mxu0
    %v408 = vadd.f32 %v339, %v407
    %v409 = vpop.f32.mrb[0].mxu0
    %410 = vdwg.mxu0
    %v411 = vtanh.pop %v408
    %v412 = vmul.f32 %v411, 2.0
    %vm413 = vcmask 31744
    %414 = vst.msk [vmem:[%s3] sm:$0xff] %vm413, %v412
    // Predicated region
    $region22: #{tpu_custom_call.1} parent=1 // pred_check
      _
    $region23: #{tpu_custom_call.1} parent=1 // pred_check_branch
      %416 = sbr.rel (0) target = $region25
    $region24: #{tpu_custom_call.1} parent=1 // pred_region
      _
    $region25: #{tpu_custom_call.1} parent=1 // pred_fallthru
      _
    // Predicated region
    $region26: #{tpu_custom_call.1} parent=1 // pred_check
      _
    $region27: #{tpu_custom_call.1} parent=1 // pred_check_branch
      %418 = sbr.rel (0) target = $region29
    $region28: #{tpu_custom_call.1} parent=1 // pred_region
      _
    $region29: #{tpu_custom_call.1} parent=1 // pred_fallthru
      _
    %419 = vsyncpa [#allocation3], 1
    %420 = vsyncpa [#allocation5], 1

</llo_original>
